<compile_context>
chip_gen: v7x
topology: tpu7x:2x2x1
jax: 0.10.0
libtpu: 0.0.40
codegen_flags: <defaults>
</compile_context>

<pallas_src>
import functools
import math

import jax
import jax.numpy as jnp
from jax.experimental import pallas as pl
from jax.experimental.pallas import tpu as pltpu


def _round_up(n, m):
    return ((n + m - 1) // m) * m


def _fold_and_act_for_device():
    """F (fold factor) and activation dtype keyed off the TPU generation."""
    try:
        kind = jax.devices()[0].device_kind.lower()
    except Exception:  # pragma: no cover - defensive; default to newest gen
        kind = ""
    if any(g in kind for g in ("v2", "v3", "v4", "v5")):
        return 4, jnp.float32   # 128-deep MXU; no bf16 VPU/EUP
    return 8, jnp.bfloat16      # v6e / v7x: 256-deep MXU, bf16 VPU/EUP


def _block_diag(w, f):
    """(K, N) -> (f*K, f*N) block-diagonal replication (trace-time, tiny)."""
    k, n = w.shape
    eye = jnp.eye(f, dtype=w.dtype)
    return jnp.einsum("ab,kn->akbn", eye, w).reshape(f * k, f * n)


def _policy_gaussian_kernel(x_ref, w1_ref, b1_ref, w2_ref, b2_ref,
                            wm_ref, bm_ref, mean_ref, *, act_dtype):
    """One folded batch tile: mean = tanh(tanh(x@W1+b1)@W2+b2)@Wm+bm."""
    cdt = w1_ref.dtype                   # MXU streaming dtype (bf16)
    x = x_ref[...].astype(cdt)           # in-kernel cast: VPU, hidden under MXU
    a1 = jnp.dot(x, w1_ref[...], preferred_element_type=jnp.float32)
    h1 = jnp.tanh(a1.astype(act_dtype)
                  + b1_ref[...].astype(act_dtype)).astype(cdt)
    a2 = jnp.dot(h1, w2_ref[...], preferred_element_type=jnp.float32)
    h2 = jnp.tanh(a2.astype(act_dtype)
                  + b2_ref[...].astype(act_dtype)).astype(cdt)
    mean = (jnp.dot(h2, wm_ref[...], preferred_element_type=jnp.float32)
            + bm_ref[...])
    mean_ref[...] = mean.astype(mean_ref.dtype)   # lane-dense store (F=8)


def policy_gaussian_forward(x, params, *, block_batch=8192,
                            compute_dtype=jnp.bfloat16,
                            fold=None, act_dtype=None):
    """Returns (action_mean, action_std) — the loc/scale of DiagGaussian."""
    w1, b1, w2, b2, wm, bm, log_std = params
    batch, state_dim = x.shape
    hidden1 = w1.shape[1]
    hidden2 = w2.shape[1]
    action_dim = wm.shape[1]

    f_def, act_def = _fold_and_act_for_device()
    F = fold if fold is not None else f_def
    act_dtype = act_dtype if act_dtype is not None else act_def

    # Block-diagonal replicated weights / lane-tiled biases (built at trace
    # time, <1 MiB bf16 total, VMEM-resident across tiles via const index_maps)
    w1b = _block_diag(w1, F).astype(compute_dtype)
    w2b = _block_diag(w2, F).astype(compute_dtype)
    wmb = _block_diag(wm, F).astype(compute_dtype)
    b1t = jnp.tile(b1.reshape(1, hidden1), (1, F))
    b2t = jnp.tile(b2.reshape(1, hidden2), (1, F))
    bmt = jnp.tile(bm.reshape(1, action_dim), (1, F))

    # Batch tile: multiple of 8*F original rows so the folded tile keeps
    # 8-sublane granularity; pad the batch only when it does not divide.
    sub = 8 * F
    tb = min(_round_up(block_batch, sub), _round_up(batch, sub))
    padded = _round_up(batch, tb)
    if padded != batch:
        # TODO(synk): at rollout scale choose block_batch so the batch divides
        # evenly; the pad / output-slice pair is the only wrapper HBM pass left.
        x = jnp.pad(x, ((0, padded - batch), (0, 0)))
    xf = x.reshape(padded // F, F * state_dim)    # free row-major batch fold

    const2d = lambda i: (0, 0)    # params stay VMEM-resident across tiles
    kernel = functools.partial(_policy_gaussian_kernel, act_dtype=act_dtype)
    mean = pl.pallas_call(
        kernel,
        out_shape=jax.ShapeDtypeStruct((padded // F, F * action_dim),
                                       jnp.float32),
        grid=(padded // tb,),
        in_specs=[
            pl.BlockSpec((tb // F, F * state_dim), lambda i: (i, 0)),  # x fold
            pl.BlockSpec((F * state_dim, F * hidden1), const2d),       # W1 bd
            pl.BlockSpec((1, F * hidden1), const2d),                   # b1
            pl.BlockSpec((F * hidden1, F * hidden2), const2d),         # W2 bd
            pl.BlockSpec((1, F * hidden2), const2d),                   # b2
            pl.BlockSpec((F * hidden2, F * action_dim), const2d),      # Wm bd
            pl.BlockSpec((1, F * action_dim), const2d),                # bm
        ],
        out_specs=pl.BlockSpec((tb // F, F * action_dim), lambda i: (i, 0)),
        compiler_params=pltpu.CompilerParams(
            dimension_semantics=("parallel",)),
    )(xf, w1b, b1t, w2b, b2t, wmb, bmt)

    mean = mean.reshape(padded, action_dim)       # free unfold
    if padded != batch:
        mean = mean[:batch]

    # action_log_std.expand_as(action_mean).exp(): x-independent -> plain JAX.
    std = jnp.broadcast_to(jnp.exp(log_std), mean.shape)
    return mean, std


def init_params(key, state_dim, hidden1, hidden2, action_dim, log_std=0.0):
    """Parameter init mirroring the PyTorch module (f32 master copies).

    action_mean weight is scaled by 0.1 and its bias zeroed, exactly as in
    PolicyGaussian.__init__; action_log_std starts at `log_std`.
    """
    k1, k2, k3 = jax.random.split(key, 3)

    def linear_init(k, fan_in, fan_out):
        bound = 1.0 / math.sqrt(fan_in)
        kw, kb = jax.random.split(k)
        w = jax.random.uniform(kw, (fan_in, fan_out), jnp.float32, -bound, bound)
        b = jax.random.uniform(kb, (1, fan_out), jnp.float32, -bound, bound)
        return w, b

    w1, b1 = linear_init(k1, state_dim, hidden1)
    w2, b2 = linear_init(k2, hidden1, hidden2)
    wm, bm = linear_init(k3, hidden2, action_dim)
    wm = wm * 0.1          # self.action_mean.weight.data.mul_(0.1)
    bm = bm * 0.0          # self.action_mean.bias.data.mul_(0.0)
    log_std_p = jnp.full((1, action_dim), log_std, jnp.float32)
    return (w1, b1, w2, b2, wm, bm, log_std_p)


def _reference_forward(x, params, compute_dtype=jnp.bfloat16, act_dtype=None):
    """Plain-JAX reference with the same bf16-stream / f32-accumulate scheme."""
    if act_dtype is None:
        _, act_dtype = _fold_and_act_for_device()
    w1, b1, w2, b2, wm, bm, log_std = params
    xc = x.astype(compute_dtype)
    a1 = jnp.dot(xc, w1.astype(compute_dtype),
                 preferred_element_type=jnp.float32)
    h1 = jnp.tanh(a1.astype(act_dtype)
                  + b1.astype(act_dtype)).astype(compute_dtype)
    a2 = jnp.dot(h1, w2.astype(compute_dtype),
                 preferred_element_type=jnp.float32)
    h2 = jnp.tanh(a2.astype(act_dtype)
                  + b2.astype(act_dtype)).astype(compute_dtype)
    mean = jnp.dot(h2, wm.astype(compute_dtype),
                   preferred_element_type=jnp.float32) + bm
    std = jnp.broadcast_to(jnp.exp(log_std), mean.shape)
    return mean, std


if __name__ == "__main__":
    # small shapes consistent with the module: policy over a state vector
    batch, state_dim, hidden1, hidden2, action_dim = 2, 32, 64, 32, 16

    key = jax.random.PRNGKey(0)
    k_x, k_p, k_x2 = jax.random.split(key, 3)
    x = jax.random.normal(k_x, (batch, state_dim), jnp.float32)
    params = init_params(k_p, state_dim, hidden1, hidden2, action_dim,
                         log_std=0.0)

    # demo-scale call (single folded tile; launch overhead dominates here —
    # real deployment is rollout-scale batches)
    mean, std = jax.jit(policy_gaussian_forward)(x, params)
    jax.block_until_ready((mean, std))
    ref_mean, ref_std = _reference_forward(x, params)
    assert mean.shape == (batch, action_dim) and std.shape == (batch, action_dim)
    assert jnp.allclose(mean, ref_mean, atol=5e-3, rtol=1e-2)
    assert jnp.allclose(std, ref_std, atol=1e-6, rtol=1e-6)

    # exercise the multi-tile batch grid (padding path + resident weights)
    x2 = jax.random.normal(k_x2, (300, state_dim), jnp.float32)
    fwd_small_tiles = jax.jit(functools.partial(policy_gaussian_forward,
                                                block_batch=128))
    mean2, std2 = fwd_small_tiles(x2, params)
    jax.block_until_ready((mean2, std2))
    ref_mean2, ref_std2 = _reference_forward(x2, params)
    assert mean2.shape == (300, action_dim)
    assert jnp.allclose(mean2, ref_mean2, atol=5e-3, rtol=1e-2)
    assert jnp.allclose(std2, ref_std2, atol=1e-6, rtol=1e-6)

    # TODO(synk): DiagGaussian.sample / log_prob / kl are distribution methods
    # outside the forward hot path; they stay in plain JAX on (mean, std).
    print("KERNEL_OK")
</pallas_src>

<mosaic_0001>
module attributes {stable_mosaic.version = 11 : i64} {
  func.func @_policy_gaussian_kernel(%arg0: i32, %arg1: memref<8x256xf32, #tpu.memory_space<vmem>>, %arg2: memref<256x512xbf16, #tpu.memory_space<vmem>>, %arg3: memref<1x512xf32, #tpu.memory_space<vmem>>, %arg4: memref<512x256xbf16, #tpu.memory_space<vmem>>, %arg5: memref<1x256xf32, #tpu.memory_space<vmem>>, %arg6: memref<256x128xbf16, #tpu.memory_space<vmem>>, %arg7: memref<1x128xf32, #tpu.memory_space<vmem>>, %arg8: memref<8x128xf32, #tpu.memory_space<vmem>>) attributes {dimension_semantics = [#tpu.dimension_semantics<parallel>], iteration_bounds = array<i64: 1>, scalar_prefetch = 0 : i64, scratch_operands = 0 : i64, tpu.core_type = #tpu.core_type<tc>, window_params = [{transform_indices = @transform_0, window_bounds = array<i64: 8, 256>}, {pipeline_mode = #tpu.pipeline_mode<synchronous>, transform_indices = @transform_1, window_bounds = array<i64: 256, 512>}, {pipeline_mode = #tpu.pipeline_mode<synchronous>, transform_indices = @transform_2, window_bounds = array<i64: 1, 512>}, {pipeline_mode = #tpu.pipeline_mode<synchronous>, transform_indices = @transform_3, window_bounds = array<i64: 512, 256>}, {pipeline_mode = #tpu.pipeline_mode<synchronous>, transform_indices = @transform_4, window_bounds = array<i64: 1, 256>}, {pipeline_mode = #tpu.pipeline_mode<synchronous>, transform_indices = @transform_5, window_bounds = array<i64: 256, 128>}, {pipeline_mode = #tpu.pipeline_mode<synchronous>, transform_indices = @transform_6, window_bounds = array<i64: 1, 128>}, {transform_indices = @transform_7, window_bounds = array<i64: 8, 128>}]} {
    %c0 = arith.constant 0 : index
    %c0_0 = arith.constant 0 : index
    %0 = vector.load %arg1[%c0, %c0_0] : memref<8x256xf32, #tpu.memory_space<vmem>>, vector<8x256xf32>
    %1 = arith.truncf %0 : vector<8x256xf32> to vector<8x256xbf16>
    %c0_1 = arith.constant 0 : index
    %c0_2 = arith.constant 0 : index
    %2 = vector.load %arg2[%c0_1, %c0_2] : memref<256x512xbf16, #tpu.memory_space<vmem>>, vector<256x512xbf16>
    %cst = arith.constant dense<0.000000e+00> : vector<8x512xf32>
    %3 = tpu.matmul %1, %2, %cst {dimension_numbers = #tpu.dot_dimension_numbers<[1], [0], [0], [1], [0, 0, 1, 1], [], []>} : vector<8x256xbf16>, vector<256x512xbf16>, vector<8x512xf32> -> vector<8x512xf32>
    %4 = arith.truncf %3 : vector<8x512xf32> to vector<8x512xbf16>
    %c0_3 = arith.constant 0 : index
    %c0_4 = arith.constant 0 : index
    %5 = vector.load %arg3[%c0_3, %c0_4] : memref<1x512xf32, #tpu.memory_space<vmem>>, vector<1x512xf32>
    %6 = arith.truncf %5 : vector<1x512xf32> to vector<1x512xbf16>
    %7 = vector.broadcast %6 : vector<1x512xbf16> to vector<8x512xbf16>
    %8 = arith.addf %4, %7 : vector<8x512xbf16>
    %9 = math.tanh %8 : vector<8x512xbf16>
    %c0_5 = arith.constant 0 : index
    %c0_6 = arith.constant 0 : index
    %10 = vector.load %arg4[%c0_5, %c0_6] : memref<512x256xbf16, #tpu.memory_space<vmem>>, vector<512x256xbf16>
    %cst_7 = arith.constant dense<0.000000e+00> : vector<8x256xf32>
    %11 = tpu.matmul %9, %10, %cst_7 {dimension_numbers = #tpu.dot_dimension_numbers<[1], [0], [0], [1], [0, 0, 1, 1], [], []>} : vector<8x512xbf16>, vector<512x256xbf16>, vector<8x256xf32> -> vector<8x256xf32>
    %12 = arith.truncf %11 : vector<8x256xf32> to vector<8x256xbf16>
    %c0_8 = arith.constant 0 : index
    %c0_9 = arith.constant 0 : index
    %13 = vector.load %arg5[%c0_8, %c0_9] : memref<1x256xf32, #tpu.memory_space<vmem>>, vector<1x256xf32>
    %14 = arith.truncf %13 : vector<1x256xf32> to vector<1x256xbf16>
    %15 = vector.broadcast %14 : vector<1x256xbf16> to vector<8x256xbf16>
    %16 = arith.addf %12, %15 : vector<8x256xbf16>
    %17 = math.tanh %16 : vector<8x256xbf16>
    %c0_10 = arith.constant 0 : index
    %c0_11 = arith.constant 0 : index
    %18 = vector.load %arg6[%c0_10, %c0_11] : memref<256x128xbf16, #tpu.memory_space<vmem>>, vector<256x128xbf16>
    %cst_12 = arith.constant dense<0.000000e+00> : vector<8x128xf32>
    %19 = tpu.matmul %17, %18, %cst_12 {dimension_numbers = #tpu.dot_dimension_numbers<[1], [0], [0], [1], [0, 0, 1, 1], [], []>} : vector<8x256xbf16>, vector<256x128xbf16>, vector<8x128xf32> -> vector<8x128xf32>
    %c0_13 = arith.constant 0 : index
    %c0_14 = arith.constant 0 : index
    %20 = vector.load %arg7[%c0_13, %c0_14] : memref<1x128xf32, #tpu.memory_space<vmem>>, vector<1x128xf32>
    %21 = vector.broadcast %20 : vector<1x128xf32> to vector<8x128xf32>
    %22 = arith.addf %19, %21 : vector<8x128xf32>
    %c0_15 = arith.constant 0 : index
    %c0_16 = arith.constant 0 : index
    %23 = vector.load %arg8[%c0_15, %c0_16] : memref<8x128xf32, #tpu.memory_space<vmem>>, vector<8x128xf32>
    tpu.vector_store %arg8[%c0_15, %c0_16], %22 {strides = array<i32>} : memref<8x128xf32, #tpu.memory_space<vmem>>, vector<8x128xf32>,
    return
  }
  func.func @transform_0(%arg0: i32) -> (i32, i32) {
    %c0_i32 = arith.constant 0 : i32
    %c0_i32_0 = arith.constant 0 : i32
    return %arg0, %c0_i32 : i32, i32
  }
  func.func @transform_1(%arg0: i32) -> (i32, i32) {
    %c0_i32 = arith.constant 0 : i32
    %c0_i32_0 = arith.constant 0 : i32
    %c0_i32_1 = arith.constant 0 : i32
    return %c0_i32, %c0_i32_0 : i32, i32
  }
  func.func @transform_2(%arg0: i32) -> (i32, i32) {
    %c0_i32 = arith.constant 0 : i32
    %c0_i32_0 = arith.constant 0 : i32
    %c0_i32_1 = arith.constant 0 : i32
    return %c0_i32, %c0_i32_0 : i32, i32
  }
  func.func @transform_3(%arg0: i32) -> (i32, i32) {
    %c0_i32 = arith.constant 0 : i32
    %c0_i32_0 = arith.constant 0 : i32
    %c0_i32_1 = arith.constant 0 : i32
    return %c0_i32, %c0_i32_0 : i32, i32
  }
  func.func @transform_4(%arg0: i32) -> (i32, i32) {
    %c0_i32 = arith.constant 0 : i32
    %c0_i32_0 = arith.constant 0 : i32
    %c0_i32_1 = arith.constant 0 : i32
    return %c0_i32, %c0_i32_0 : i32, i32
  }
  func.func @transform_5(%arg0: i32) -> (i32, i32) {
    %c0_i32 = arith.constant 0 : i32
    %c0_i32_0 = arith.constant 0 : i32
    %c0_i32_1 = arith.constant 0 : i32
    return %c0_i32, %c0_i32_0 : i32, i32
  }
  func.func @transform_6(%arg0: i32) -> (i32, i32) {
    %c0_i32 = arith.constant 0 : i32
    %c0_i32_0 = arith.constant 0 : i32
    %c0_i32_1 = arith.constant 0 : i32
    return %c0_i32, %c0_i32_0 : i32, i32
  }
  func.func @transform_7(%arg0: i32) -> (i32, i32) {
    %c0_i32 = arith.constant 0 : i32
    %c0_i32_0 = arith.constant 0 : i32
    return %arg0, %c0_i32 : i32, i32
  }
}

</mosaic_0001>

<llo_original>
// kernel: policy_gaussian_forward.1
$region0: #{policy_gaussian_forward.1}
  #allocation0 [shape = 'u32[]', space=smem, size = 0x4, offset = 0x4, fixed_abs, tag = 'smem constant byte address 0x4 - core index']
  #allocation1 [shape = 'u32[144,128]{1,0:T(1,128)}', space=vmem, size = 0x12000, scoped, tag = 'internal scratch']
  %s0 = inlined_call_operand.vmem [shape: f32[8,256], index: 0, kind: input, shape index: {}]
  %s1 = inlined_call_operand.vmem [shape: bf16[256,512], index: 1, kind: input, shape index: {}]
  %s2 = inlined_call_operand.vmem [shape: f32[1,512], index: 2, kind: input, shape index: {}]
  %s3 = inlined_call_operand.vmem [shape: bf16[512,256], index: 3, kind: input, shape index: {}]
  %s4 = inlined_call_operand.vmem [shape: f32[1,256], index: 4, kind: input, shape index: {}]
  %s5 = inlined_call_operand.vmem [shape: bf16[256,128], index: 5, kind: input, shape index: {}]
  %s6 = inlined_call_operand.vmem [shape: f32[1,128], index: 6, kind: input, shape index: {}]
  %s7 = inlined_call_operand.vmem [shape: f32[8,128], index: 7, kind: output, shape index: {}]
  %s8 = sld [smem:[#allocation0]]
  $region38: #{policy_gaussian_forward.1} parent=0
    _
  %s10 = ssub.s32 1, %s8
  %s11 = scalar_select 0, %s10, %s8
  // Predicated region
  $region2: #{policy_gaussian_forward.1} parent=0 // pred_check
    _
  $region3: #{policy_gaussian_forward.1} parent=0 // pred_check_branch
    %13 = sbr.rel (0) target = $region5
  $region4: #{policy_gaussian_forward.1} parent=0 // pred_region
    _
  $region5: #{policy_gaussian_forward.1} parent=0 // pred_fallthru
    _
  // Predicated region
  $region6: #{policy_gaussian_forward.1} parent=0 // pred_check
    _
  $region7: #{policy_gaussian_forward.1} parent=0 // pred_check_branch
    %15 = sbr.rel (0) target = $region9
  $region8: #{policy_gaussian_forward.1} parent=0 // pred_region
    _
  $region9: #{policy_gaussian_forward.1} parent=0 // pred_fallthru
    _
  // Predicated region
  $region10: #{policy_gaussian_forward.1} parent=0 // pred_check
    _
  $region11: #{policy_gaussian_forward.1} parent=0 // pred_check_branch
    %17 = sbr.rel (0) target = $region13
  $region12: #{policy_gaussian_forward.1} parent=0 // pred_region
    _
  $region13: #{policy_gaussian_forward.1} parent=0 // pred_fallthru
    _
  // Predicated region
  $region14: #{policy_gaussian_forward.1} parent=0 // pred_check
    _
  $region15: #{policy_gaussian_forward.1} parent=0 // pred_check_branch
    %19 = sbr.rel (0) target = $region17
  $region16: #{policy_gaussian_forward.1} parent=0 // pred_region
    _
  $region17: #{policy_gaussian_forward.1} parent=0 // pred_fallthru
    _
  // Predicated region
  $region18: #{policy_gaussian_forward.1} parent=0 // pred_check
    _
  $region19: #{policy_gaussian_forward.1} parent=0 // pred_check_branch
    %21 = sbr.rel (0) target = $region21
  $region20: #{policy_gaussian_forward.1} parent=0 // pred_region
    _
  $region21: #{policy_gaussian_forward.1} parent=0 // pred_fallthru
    _
  // Predicated region
  $region22: #{policy_gaussian_forward.1} parent=0 // pred_check
    _
  $region23: #{policy_gaussian_forward.1} parent=0 // pred_check_branch
    %23 = sbr.rel (0) target = $region25
  $region24: #{policy_gaussian_forward.1} parent=0 // pred_region
    _
  $region25: #{policy_gaussian_forward.1} parent=0 // pred_fallthru
    _
  // Predicated region
  $region26: #{policy_gaussian_forward.1} parent=0 // pred_check
    _
  $region27: #{policy_gaussian_forward.1} parent=0 // pred_check_branch
    %25 = sbr.rel (0) target = $region29
  $region28: #{policy_gaussian_forward.1} parent=0 // pred_region
    _
  $region29: #{policy_gaussian_forward.1} parent=0 // pred_fallthru
    _
  %v27 = vld [vmem:[%s0] sm:$0xff]
  %v28 = vld [vmem:[%s0 + $0x8] sm:$0xff]
  %v29 = vpack.c.bf16 %v27, %v27
  %v30 = vpack.c.bf16 %v28, %v28
  %v31 = vld [vmem:[%s1] sm:$0xff]
  %v32 = vld [vmem:[%s1 + $0x8] sm:$0xff]
  %v33 = vld [vmem:[%s1 + $0x10] sm:$0xff]
  %v34 = vld [vmem:[%s1 + $0x18] sm:$0xff]
  %v35 = vld [vmem:[%s1 + $0x20] sm:$0xff]
  %v36 = vld [vmem:[%s1 + $0x28] sm:$0xff]
  %v37 = vld [vmem:[%s1 + $0x30] sm:$0xff]
  %v38 = vld [vmem:[%s1 + $0x38] sm:$0xff]
  %v39 = vld [vmem:[%s1 + $0x40] sm:$0xff]
  %v40 = vld [vmem:[%s1 + $0x48] sm:$0xff]
  %v41 = vld [vmem:[%s1 + $0x50] sm:$0xff]
  %v42 = vld [vmem:[%s1 + $0x58] sm:$0xff]
  %v43 = vld [vmem:[%s1 + $0x60] sm:$0xff]
  %v44 = vld [vmem:[%s1 + $0x68] sm:$0xff]
  %v45 = vld [vmem:[%s1 + $0x70] sm:$0xff]
  %v46 = vld [vmem:[%s1 + $0x78] sm:$0xff]
  %v47 = vld [vmem:[%s1 + $0x80] sm:$0xff]
  %v48 = vld [vmem:[%s1 + $0x88] sm:$0xff]
  %v49 = vld [vmem:[%s1 + $0x90] sm:$0xff]
  %v50 = vld [vmem:[%s1 + $0x98] sm:$0xff]
  %v51 = vld [vmem:[%s1 + $0xa0] sm:$0xff]
  %v52 = vld [vmem:[%s1 + $0xa8] sm:$0xff]
  %v53 = vld [vmem:[%s1 + $0xb0] sm:$0xff]
  %v54 = vld [vmem:[%s1 + $0xb8] sm:$0xff]
  %v55 = vld [vmem:[%s1 + $0xc0] sm:$0xff]
  %v56 = vld [vmem:[%s1 + $0xc8] sm:$0xff]
  %v57 = vld [vmem:[%s1 + $0xd0] sm:$0xff]
  %v58 = vld [vmem:[%s1 + $0xd8] sm:$0xff]
  %v59 = vld [vmem:[%s1 + $0xe0] sm:$0xff]
  %v60 = vld [vmem:[%s1 + $0xe8] sm:$0xff]
  %v61 = vld [vmem:[%s1 + $0xf0] sm:$0xff]
  %v62 = vld [vmem:[%s1 + $0xf8] sm:$0xff]
  %v63 = vld [vmem:[%s1 + $0x100] sm:$0xff]
  %v64 = vld [vmem:[%s1 + $0x108] sm:$0xff]
  %v65 = vld [vmem:[%s1 + $0x110] sm:$0xff]
  %v66 = vld [vmem:[%s1 + $0x118] sm:$0xff]
  %v67 = vld [vmem:[%s1 + $0x120] sm:$0xff]
  %v68 = vld [vmem:[%s1 + $0x128] sm:$0xff]
  %v69 = vld [vmem:[%s1 + $0x130] sm:$0xff]
  %v70 = vld [vmem:[%s1 + $0x138] sm:$0xff]
  %v71 = vld [vmem:[%s1 + $0x140] sm:$0xff]
  %v72 = vld [vmem:[%s1 + $0x148] sm:$0xff]
  %v73 = vld [vmem:[%s1 + $0x150] sm:$0xff]
  %v74 = vld [vmem:[%s1 + $0x158] sm:$0xff]
  %v75 = vld [vmem:[%s1 + $0x160] sm:$0xff]
  %v76 = vld [vmem:[%s1 + $0x168] sm:$0xff]
  %v77 = vld [vmem:[%s1 + $0x170] sm:$0xff]
  %v78 = vld [vmem:[%s1 + $0x178] sm:$0xff]
  %v79 = vld [vmem:[%s1 + $0x180] sm:$0xff]
  %v80 = vld [vmem:[%s1 + $0x188] sm:$0xff]
  %v81 = vld [vmem:[%s1 + $0x190] sm:$0xff]
  %v82 = vld [vmem:[%s1 + $0x198] sm:$0xff]
  %v83 = vld [vmem:[%s1 + $0x1a0] sm:$0xff]
  %v84 = vld [vmem:[%s1 + $0x1a8] sm:$0xff]
  %v85 = vld [vmem:[%s1 + $0x1b0] sm:$0xff]
  %v86 = vld [vmem:[%s1 + $0x1b8] sm:$0xff]
  %v87 = vld [vmem:[%s1 + $0x1c0] sm:$0xff]
  %v88 = vld [vmem:[%s1 + $0x1c8] sm:$0xff]
  %v89 = vld [vmem:[%s1 + $0x1d0] sm:$0xff]
  %v90 = vld [vmem:[%s1 + $0x1d8] sm:$0xff]
  %v91 = vld [vmem:[%s1 + $0x1e0] sm:$0xff]
  %v92 = vld [vmem:[%s1 + $0x1e8] sm:$0xff]
  %v93 = vld [vmem:[%s1 + $0x1f0] sm:$0xff]
  %v94 = vld [vmem:[%s1 + $0x1f8] sm:$0xff]
  %v159 = vunpack.c.l.b16 %v31
  %v160 = vunpack.c.h.b16 %v31
  %v161 = vunpack.c.l.b16 %v32
  %v162 = vunpack.c.h.b16 %v32
  %v163 = vunpack.c.l.b16 %v33
  %v164 = vunpack.c.h.b16 %v33
  %v165 = vunpack.c.l.b16 %v34
  %v166 = vunpack.c.h.b16 %v34
  %v167 = vunpack.c.l.b16 %v35
  %v168 = vunpack.c.h.b16 %v35
  %v169 = vunpack.c.l.b16 %v36
  %v170 = vunpack.c.h.b16 %v36
  %v171 = vunpack.c.l.b16 %v37
  %v172 = vunpack.c.h.b16 %v37
  %v173 = vunpack.c.l.b16 %v38
  %v174 = vunpack.c.h.b16 %v38
  %v175 = vunpack.c.l.b16 %v39
  %v176 = vunpack.c.h.b16 %v39
  %v177 = vunpack.c.l.b16 %v40
  %v178 = vunpack.c.h.b16 %v40
  %v179 = vunpack.c.l.b16 %v41
  %v180 = vunpack.c.h.b16 %v41
  %v181 = vunpack.c.l.b16 %v42
  %v182 = vunpack.c.h.b16 %v42
  %v183 = vunpack.c.l.b16 %v43
  %v184 = vunpack.c.h.b16 %v43
  %v185 = vunpack.c.l.b16 %v44
  %v186 = vunpack.c.h.b16 %v44
  %v187 = vunpack.c.l.b16 %v45
  %v188 = vunpack.c.h.b16 %v45
  %v189 = vunpack.c.l.b16 %v46
  %v190 = vunpack.c.h.b16 %v46
  %v191 = vunpack.c.l.b16 %v47
  %v192 = vunpack.c.h.b16 %v47
  %v193 = vunpack.c.l.b16 %v48
  %v194 = vunpack.c.h.b16 %v48
  %v195 = vunpack.c.l.b16 %v49
  %v196 = vunpack.c.h.b16 %v49
  %v197 = vunpack.c.l.b16 %v50
  %v198 = vunpack.c.h.b16 %v50
  %v199 = vunpack.c.l.b16 %v51
  %v200 = vunpack.c.h.b16 %v51
  %v201 = vunpack.c.l.b16 %v52
  %v202 = vunpack.c.h.b16 %v52
  %v203 = vunpack.c.l.b16 %v53
  %v204 = vunpack.c.h.b16 %v53
  %v205 = vunpack.c.l.b16 %v54
  %v206 = vunpack.c.h.b16 %v54
  %v207 = vunpack.c.l.b16 %v55
  %v208 = vunpack.c.h.b16 %v55
  %v209 = vunpack.c.l.b16 %v56
  %v210 = vunpack.c.h.b16 %v56
  %v211 = vunpack.c.l.b16 %v57
  %v212 = vunpack.c.h.b16 %v57
  %v213 = vunpack.c.l.b16 %v58
  %v214 = vunpack.c.h.b16 %v58
  %v215 = vunpack.c.l.b16 %v59
  %v216 = vunpack.c.h.b16 %v59
  %v217 = vunpack.c.l.b16 %v60
  %v218 = vunpack.c.h.b16 %v60
  %v219 = vunpack.c.l.b16 %v61
  %v220 = vunpack.c.h.b16 %v61
  %v221 = vunpack.c.l.b16 %v62
  %v222 = vunpack.c.h.b16 %v62
  %v223 = vunpack.c.l.b16 %v63
  %v224 = vunpack.c.h.b16 %v63
  %v225 = vunpack.c.l.b16 %v64
  %v226 = vunpack.c.h.b16 %v64
  %v227 = vunpack.c.l.b16 %v65
  %v228 = vunpack.c.h.b16 %v65
  %v229 = vunpack.c.l.b16 %v66
  %v230 = vunpack.c.h.b16 %v66
  %v231 = vunpack.c.l.b16 %v67
  %v232 = vunpack.c.h.b16 %v67
  %v233 = vunpack.c.l.b16 %v68
  %v234 = vunpack.c.h.b16 %v68
  %v235 = vunpack.c.l.b16 %v69
  %v236 = vunpack.c.h.b16 %v69
  %v237 = vunpack.c.l.b16 %v70
  %v238 = vunpack.c.h.b16 %v70
  %v239 = vunpack.c.l.b16 %v71
  %v240 = vunpack.c.h.b16 %v71
  %v241 = vunpack.c.l.b16 %v72
  %v242 = vunpack.c.h.b16 %v72
  %v243 = vunpack.c.l.b16 %v73
  %v244 = vunpack.c.h.b16 %v73
  %v245 = vunpack.c.l.b16 %v74
  %v246 = vunpack.c.h.b16 %v74
  %v247 = vunpack.c.l.b16 %v75
  %v248 = vunpack.c.h.b16 %v75
  %v249 = vunpack.c.l.b16 %v76
  %v250 = vunpack.c.h.b16 %v76
  %v251 = vunpack.c.l.b16 %v77
  %v252 = vunpack.c.h.b16 %v77
  %v253 = vunpack.c.l.b16 %v78
  %v254 = vunpack.c.h.b16 %v78
  %v255 = vunpack.c.l.b16 %v79
  %v256 = vunpack.c.h.b16 %v79
  %v257 = vunpack.c.l.b16 %v80
  %v258 = vunpack.c.h.b16 %v80
  %v259 = vunpack.c.l.b16 %v81
  %v260 = vunpack.c.h.b16 %v81
  %v261 = vunpack.c.l.b16 %v82
  %v262 = vunpack.c.h.b16 %v82
  %v263 = vunpack.c.l.b16 %v83
  %v264 = vunpack.c.h.b16 %v83
  %v265 = vunpack.c.l.b16 %v84
  %v266 = vunpack.c.h.b16 %v84
  %v267 = vunpack.c.l.b16 %v85
  %v268 = vunpack.c.h.b16 %v85
  %v269 = vunpack.c.l.b16 %v86
  %v270 = vunpack.c.h.b16 %v86
  %v271 = vunpack.c.l.b16 %v87
  %v272 = vunpack.c.h.b16 %v87
  %v273 = vunpack.c.l.b16 %v88
  %v274 = vunpack.c.h.b16 %v88
  %v275 = vunpack.c.l.b16 %v89
  %v276 = vunpack.c.h.b16 %v89
  %v277 = vunpack.c.l.b16 %v90
  %v278 = vunpack.c.h.b16 %v90
  %v279 = vunpack.c.l.b16 %v91
  %v280 = vunpack.c.h.b16 %v91
  %v281 = vunpack.c.l.b16 %v92
  %v282 = vunpack.c.h.b16 %v92
  %v283 = vunpack.c.l.b16 %v93
  %v284 = vunpack.c.h.b16 %v93
  %v285 = vunpack.c.l.b16 %v94
  %v286 = vunpack.c.h.b16 %v94
  %v287 = vpack.c.b16 %v163, %v159
  %v288 = vpack.c.b16 %v164, %v160
  %v289 = vpack.c.b16 %v165, %v161
  %v290 = vpack.c.b16 %v166, %v162
  %v291 = vpack.c.b16 %v171, %v167
  %v292 = vpack.c.b16 %v172, %v168
  %v293 = vpack.c.b16 %v173, %v169
  %v294 = vpack.c.b16 %v174, %v170
  %v295 = vpack.c.b16 %v179, %v175
  %v296 = vpack.c.b16 %v180, %v176
  %v297 = vpack.c.b16 %v181, %v177
  %v298 = vpack.c.b16 %v182, %v178
  %v299 = vpack.c.b16 %v187, %v183
  %v300 = vpack.c.b16 %v188, %v184
  %v301 = vpack.c.b16 %v189, %v185
  %v302 = vpack.c.b16 %v190, %v186
  %v303 = vpack.c.b16 %v195, %v191
  %v304 = vpack.c.b16 %v196, %v192
  %v305 = vpack.c.b16 %v197, %v193
  %v306 = vpack.c.b16 %v198, %v194
  %v307 = vpack.c.b16 %v203, %v199
  %v308 = vpack.c.b16 %v204, %v200
  %v309 = vpack.c.b16 %v205, %v201
  %v310 = vpack.c.b16 %v206, %v202
  %v311 = vpack.c.b16 %v211, %v207
  %v312 = vpack.c.b16 %v212, %v208
  %v313 = vpack.c.b16 %v213, %v209
  %v314 = vpack.c.b16 %v214, %v210
  %v315 = vpack.c.b16 %v219, %v215
  %v316 = vpack.c.b16 %v220, %v216
  %v317 = vpack.c.b16 %v221, %v217
  %v318 = vpack.c.b16 %v222, %v218
  %v319 = vpack.c.b16 %v227, %v223
  %v320 = vpack.c.b16 %v228, %v224
  %v321 = vpack.c.b16 %v229, %v225
  %v322 = vpack.c.b16 %v230, %v226
  %v323 = vpack.c.b16 %v235, %v231
  %v324 = vpack.c.b16 %v236, %v232
  %v325 = vpack.c.b16 %v237, %v233
  %v326 = vpack.c.b16 %v238, %v234
  %v327 = vpack.c.b16 %v243, %v239
  %v328 = vpack.c.b16 %v244, %v240
  %v329 = vpack.c.b16 %v245, %v241
  %v330 = vpack.c.b16 %v246, %v242
  %v331 = vpack.c.b16 %v251, %v247
  %v332 = vpack.c.b16 %v252, %v248
  %v333 = vpack.c.b16 %v253, %v249
  %v334 = vpack.c.b16 %v254, %v250
  %v335 = vpack.c.b16 %v259, %v255
  %v336 = vpack.c.b16 %v260, %v256
  %v337 = vpack.c.b16 %v261, %v257
  %v338 = vpack.c.b16 %v262, %v258
  %v339 = vpack.c.b16 %v267, %v263
  %v340 = vpack.c.b16 %v268, %v264
  %v341 = vpack.c.b16 %v269, %v265
  %v342 = vpack.c.b16 %v270, %v266
  %v343 = vpack.c.b16 %v275, %v271
  %v344 = vpack.c.b16 %v276, %v272
  %v345 = vpack.c.b16 %v277, %v273
  %v346 = vpack.c.b16 %v278, %v274
  %v347 = vpack.c.b16 %v283, %v279
  %v348 = vpack.c.b16 %v284, %v280
  %v349 = vpack.c.b16 %v285, %v281
  %v350 = vpack.c.b16 %v286, %v282
  %415 = vmatprep.subr.bf16.mxu0 %v288
  %416 = vmatpush1.bf16.msra.mxu0 %v287
  %417 = vmatprep.subr.bf16.mxu0 %v292
  %418 = vmatpush1.bf16.msra.mxu0 %v291
  %419 = vmatprep.subr.bf16.mxu0 %v296
  %420 = vmatpush1.bf16.msra.mxu0 %v295
  %421 = vmatprep.subr.bf16.mxu0 %v300
  %422 = vmatpush1.bf16.msra.mxu0 %v299
  %423 = vmatprep.subr.bf16.mxu0 %v304
  %424 = vmatpush1.bf16.msra.mxu0 %v303
  %425 = vmatprep.subr.bf16.mxu0 %v308
  %426 = vmatpush1.bf16.msra.mxu0 %v307
  %427 = vmatprep.subr.bf16.mxu0 %v312
  %428 = vmatpush1.bf16.msra.mxu0 %v311
  %429 = vmatprep.subr.bf16.mxu0 %v316
  %430 = vmatpush1.bf16.msra.mxu0 %v315
  %431 = vmatprep.subr.bf16.mxu0 %v320
  %432 = vmatpush1.bf16.msra.mxu0 %v319
  %433 = vmatprep.subr.bf16.mxu0 %v324
  %434 = vmatpush1.bf16.msra.mxu0 %v323
  %435 = vmatprep.subr.bf16.mxu0 %v328
  %436 = vmatpush1.bf16.msra.mxu0 %v327
  %437 = vmatprep.subr.bf16.mxu0 %v332
  %438 = vmatpush1.bf16.msra.mxu0 %v331
  %439 = vmatprep.subr.bf16.mxu0 %v336
  %440 = vmatpush1.bf16.msra.mxu0 %v335
  %441 = vmatprep.subr.bf16.mxu0 %v340
  %442 = vmatpush1.bf16.msra.mxu0 %v339
  %443 = vmatprep.subr.bf16.mxu0 %v344
  %444 = vmatpush1.bf16.msra.mxu0 %v343
  %445 = vmatprep.subr.bf16.mxu0 %v348
  %446 = vmatpush1.bf16.msra.mxu0 %v347
  %447 = vmatprep.mubr.bf16.mxu0 %v30
  %448 = vmatmul.mubr.bf16.gmra.mrb[0].mxu0 %v29
  %v449 = vpop.f32.mrb[0].mxu0
  %v450 = vadd.f32 0.0, %v449
  %v451 = vpop.f32.mrb[0].mxu0
  %v452 = vadd.f32 0.0, %v451
  %v453 = vpop.f32.mrb[0].mxu0
  %v454 = vpop.f32.mrb[0].mxu0
  %455 = vdwg.mxu0
  %456 = vmatprep.subr.bf16.mxu0 %v290
  %457 = vmatpush1.bf16.msra.mxu0 %v289
  %458 = vmatprep.subr.bf16.mxu0 %v294
  %459 = vmatpush1.bf16.msra.mxu0 %v293
  %460 = vmatprep.subr.bf16.mxu0 %v298
  %461 = vmatpush1.bf16.msra.mxu0 %v297
  %462 = vmatprep.subr.bf16.mxu0 %v302
  %463 = vmatpush1.bf16.msra.mxu0 %v301
  %464 = vmatprep.subr.bf16.mxu0 %v306
  %465 = vmatpush1.bf16.msra.mxu0 %v305
  %466 = vmatprep.subr.bf16.mxu0 %v310
  %467 = vmatpush1.bf16.msra.mxu0 %v309
  %468 = vmatprep.subr.bf16.mxu0 %v314
  %469 = vmatpush1.bf16.msra.mxu0 %v313
  %470 = vmatprep.subr.bf16.mxu0 %v318
  %471 = vmatpush1.bf16.msra.mxu0 %v317
  %472 = vmatprep.subr.bf16.mxu0 %v322
  %473 = vmatpush1.bf16.msra.mxu0 %v321
  %474 = vmatprep.subr.bf16.mxu0 %v326
  %475 = vmatpush1.bf16.msra.mxu0 %v325
  %476 = vmatprep.subr.bf16.mxu0 %v330
  %477 = vmatpush1.bf16.msra.mxu0 %v329
  %478 = vmatprep.subr.bf16.mxu0 %v334
  %479 = vmatpush1.bf16.msra.mxu0 %v333
  %480 = vmatprep.subr.bf16.mxu0 %v338
  %481 = vmatpush1.bf16.msra.mxu0 %v337
  %482 = vmatprep.subr.bf16.mxu0 %v342
  %483 = vmatpush1.bf16.msra.mxu0 %v341
  %484 = vmatprep.subr.bf16.mxu0 %v346
  %485 = vmatpush1.bf16.msra.mxu0 %v345
  %486 = vmatprep.subr.bf16.mxu0 %v350
  %487 = vmatpush1.bf16.msra.mxu0 %v349
  %488 = vmatprep.mubr.bf16.mxu0 %v30
  %489 = vmatmul.mubr.bf16.gmra.mrb[0].mxu0 %v29
  %v490 = vpop.f32.mrb[0].mxu0
  %v491 = vadd.f32 0.0, %v490
  %v492 = vpop.f32.mrb[0].mxu0
  %v493 = vadd.f32 0.0, %v492
  %v494 = vpop.f32.mrb[0].mxu0
  %v495 = vpop.f32.mrb[0].mxu0
  %496 = vdwg.mxu0
  %v497 = vpack.c.bf16 %v450, %v450
  %v498 = vpack.c.bf16 %v452, %v452
  %v499 = vpack.c.bf16 %v491, %v491
  %v500 = vpack.c.bf16 %v493, %v493
  %v501 = vld [vmem:[%s2] sm:$0xf]
  %v503 = vlaneseq
  %v504 = vshrl.u32 %v503, 7
  %v505 = vsub.s32 0, %v504
  %v506 = vrot.slane %v501, %v505
  %v507 = vlaneseq
  %v508 = vshrl.u32 %v507, 7
  %v509 = vsub.s32 1, %v508
  %v510 = vrot.slane %v501, %v509
  %v511 = vlaneseq
  %v512 = vshrl.u32 %v511, 7
  %v513 = vsub.s32 2, %v512
  %v514 = vrot.slane %v501, %v513
  %v515 = vlaneseq
  %v516 = vshrl.u32 %v515, 7
  %v517 = vsub.s32 3, %v516
  %v518 = vrot.slane %v501, %v517
  %v523 = vpack.c.bf16 %v506, %v506
  %v524 = vpack.c.bf16 %v510, %v510
  %v525 = vpack.c.bf16 %v514, %v514
  %v526 = vpack.c.bf16 %v518, %v518
  %v528 = vpack.i.b16 %v523, %v523
  %v530 = vlaneseq
  %v531 = vshrl.u32 %v530, 7
  %v532 = vsub.s32 0, %v531
  %v533 = vrot.slane %v528, %v532
  %v535 = vpack.i.b16 %v524, %v524
  %v537 = vlaneseq
  %v538 = vshrl.u32 %v537, 7
  %v539 = vsub.s32 0, %v538
  %v540 = vrot.slane %v535, %v539
  %v542 = vpack.i.b16 %v525, %v525
  %v544 = vlaneseq
  %v545 = vshrl.u32 %v544, 7
  %v546 = vsub.s32 0, %v545
  %v547 = vrot.slane %v542, %v546
  %v549 = vpack.i.b16 %v526, %v526
  %v551 = vlaneseq
  %v552 = vshrl.u32 %v551, 7
  %v553 = vsub.s32 0, %v552
  %v554 = vrot.slane %v549, %v553
  %v555 = vadd.bf16 %v497, %v533
  %v556 = vadd.bf16 %v498, %v540
  %v557 = vadd.bf16 %v499, %v547
  %v558 = vadd.bf16 %v500, %v554
  %v559 = vtanh.bf16.pop %v555
  %v560 = vtanh.bf16.pop %v556
  %v561 = vtanh.bf16.pop %v557
  %v562 = vtanh.bf16.pop %v558
  %v563 = vld [vmem:[%s3] sm:$0xff]
  %v564 = vld [vmem:[%s3 + $0x8] sm:$0xff]
  %v565 = vld [vmem:[%s3 + $0x10] sm:$0xff]
  %v566 = vld [vmem:[%s3 + $0x18] sm:$0xff]
  %v567 = vld [vmem:[%s3 + $0x20] sm:$0xff]
  %v568 = vld [vmem:[%s3 + $0x28] sm:$0xff]
  %v569 = vld [vmem:[%s3 + $0x30] sm:$0xff]
  %v570 = vld [vmem:[%s3 + $0x38] sm:$0xff]
  %v571 = vld [vmem:[%s3 + $0x40] sm:$0xff]
  %v572 = vld [vmem:[%s3 + $0x48] sm:$0xff]
  %v573 = vld [vmem:[%s3 + $0x50] sm:$0xff]
  %v574 = vld [vmem:[%s3 + $0x58] sm:$0xff]
  %v575 = vld [vmem:[%s3 + $0x60] sm:$0xff]
  %v576 = vld [vmem:[%s3 + $0x68] sm:$0xff]
  %v577 = vld [vmem:[%s3 + $0x70] sm:$0xff]
  %v578 = vld [vmem:[%s3 + $0x78] sm:$0xff]
  %v579 = vld [vmem:[%s3 + $0x80] sm:$0xff]
  %v580 = vld [vmem:[%s3 + $0x88] sm:$0xff]
  %v581 = vld [vmem:[%s3 + $0x90] sm:$0xff]
  %v582 = vld [vmem:[%s3 + $0x98] sm:$0xff]
  %v583 = vld [vmem:[%s3 + $0xa0] sm:$0xff]
  %v584 = vld [vmem:[%s3 + $0xa8] sm:$0xff]
  %v585 = vld [vmem:[%s3 + $0xb0] sm:$0xff]
  %v586 = vld [vmem:[%s3 + $0xb8] sm:$0xff]
  %v587 = vld [vmem:[%s3 + $0xc0] sm:$0xff]
  %v588 = vld [vmem:[%s3 + $0xc8] sm:$0xff]
  %v589 = vld [vmem:[%s3 + $0xd0] sm:$0xff]
  %v590 = vld [vmem:[%s3 + $0xd8] sm:$0xff]
  %v591 = vld [vmem:[%s3 + $0xe0] sm:$0xff]
  %v592 = vld [vmem:[%s3 + $0xe8] sm:$0xff]
  %v593 = vld [vmem:[%s3 + $0xf0] sm:$0xff]
  %v594 = vld [vmem:[%s3 + $0xf8] sm:$0xff]
  %v595 = vld [vmem:[%s3 + $0x100] sm:$0xff]
  %v596 = vld [vmem:[%s3 + $0x108] sm:$0xff]
  %v597 = vld [vmem:[%s3 + $0x110] sm:$0xff]
  %v598 = vld [vmem:[%s3 + $0x118] sm:$0xff]
  %v599 = vld [vmem:[%s3 + $0x120] sm:$0xff]
  %v600 = vld [vmem:[%s3 + $0x128] sm:$0xff]
  %v601 = vld [vmem:[%s3 + $0x130] sm:$0xff]
  %v602 = vld [vmem:[%s3 + $0x138] sm:$0xff]
  %v603 = vld [vmem:[%s3 + $0x140] sm:$0xff]
  %v604 = vld [vmem:[%s3 + $0x148] sm:$0xff]
  %v605 = vld [vmem:[%s3 + $0x150] sm:$0xff]
  %v606 = vld [vmem:[%s3 + $0x158] sm:$0xff]
  %v607 = vld [vmem:[%s3 + $0x160] sm:$0xff]
  %v608 = vld [vmem:[%s3 + $0x168] sm:$0xff]
  %v609 = vld [vmem:[%s3 + $0x170] sm:$0xff]
  %v610 = vld [vmem:[%s3 + $0x178] sm:$0xff]
  %v611 = vld [vmem:[%s3 + $0x180] sm:$0xff]
  %v612 = vld [vmem:[%s3 + $0x188] sm:$0xff]
  %v613 = vld [vmem:[%s3 + $0x190] sm:$0xff]
  %v614 = vld [vmem:[%s3 + $0x198] sm:$0xff]
  %v615 = vld [vmem:[%s3 + $0x1a0] sm:$0xff]
  %v616 = vld [vmem:[%s3 + $0x1a8] sm:$0xff]
  %v617 = vld [vmem:[%s3 + $0x1b0] sm:$0xff]
  %v618 = vld [vmem:[%s3 + $0x1b8] sm:$0xff]
  %v619 = vld [vmem:[%s3 + $0x1c0] sm:$0xff]
  %v620 = vld [vmem:[%s3 + $0x1c8] sm:$0xff]
  %v621 = vld [vmem:[%s3 + $0x1d0] sm:$0xff]
  %v622 = vld [vmem:[%s3 + $0x1d8] sm:$0xff]
  %v623 = vld [vmem:[%s3 + $0x1e0] sm:$0xff]
  %v624 = vld [vmem:[%s3 + $0x1e8] sm:$0xff]
  %v625 = vld [vmem:[%s3 + $0x1f0] sm:$0xff]
  %v626 = vld [vmem:[%s3 + $0x1f8] sm:$0xff]
  %v691 = vunpack.c.l.b16 %v563
  %v692 = vunpack.c.h.b16 %v563
  %v693 = vunpack.c.l.b16 %v564
  %v694 = vunpack.c.h.b16 %v564
  %v695 = vunpack.c.l.b16 %v565
  %v696 = vunpack.c.h.b16 %v565
  %v697 = vunpack.c.l.b16 %v566
  %v698 = vunpack.c.h.b16 %v566
  %v699 = vunpack.c.l.b16 %v567
  %v700 = vunpack.c.h.b16 %v567
  %v701 = vunpack.c.l.b16 %v568
  %v702 = vunpack.c.h.b16 %v568
  %v703 = vunpack.c.l.b16 %v569
  %v704 = vunpack.c.h.b16 %v569
  %v705 = vunpack.c.l.b16 %v570
  %v706 = vunpack.c.h.b16 %v570
  %v707 = vunpack.c.l.b16 %v571
  %v708 = vunpack.c.h.b16 %v571
  %v709 = vunpack.c.l.b16 %v572
  %v710 = vunpack.c.h.b16 %v572
  %v711 = vunpack.c.l.b16 %v573
  %v712 = vunpack.c.h.b16 %v573
  %v713 = vunpack.c.l.b16 %v574
  %v714 = vunpack.c.h.b16 %v574
  %v715 = vunpack.c.l.b16 %v575
  %v716 = vunpack.c.h.b16 %v575
  %v717 = vunpack.c.l.b16 %v576
  %v718 = vunpack.c.h.b16 %v576
  %v719 = vunpack.c.l.b16 %v577
  %v720 = vunpack.c.h.b16 %v577
  %v721 = vunpack.c.l.b16 %v578
  %v722 = vunpack.c.h.b16 %v578
  %v723 = vunpack.c.l.b16 %v579
  %v724 = vunpack.c.h.b16 %v579
  %v725 = vunpack.c.l.b16 %v580
  %v726 = vunpack.c.h.b16 %v580
  %v727 = vunpack.c.l.b16 %v581
  %v728 = vunpack.c.h.b16 %v581
  %v729 = vunpack.c.l.b16 %v582
  %v730 = vunpack.c.h.b16 %v582
  %v731 = vunpack.c.l.b16 %v583
  %v732 = vunpack.c.h.b16 %v583
  %v733 = vunpack.c.l.b16 %v584
  %v734 = vunpack.c.h.b16 %v584
  %v735 = vunpack.c.l.b16 %v585
  %v736 = vunpack.c.h.b16 %v585
  %v737 = vunpack.c.l.b16 %v586
  %v738 = vunpack.c.h.b16 %v586
  %v739 = vunpack.c.l.b16 %v587
  %v740 = vunpack.c.h.b16 %v587
  %v741 = vunpack.c.l.b16 %v588
  %v742 = vunpack.c.h.b16 %v588
  %v743 = vunpack.c.l.b16 %v589
  %v744 = vunpack.c.h.b16 %v589
  %v745 = vunpack.c.l.b16 %v590
  %v746 = vunpack.c.h.b16 %v590
  %v747 = vunpack.c.l.b16 %v591
  %v748 = vunpack.c.h.b16 %v591
  %v749 = vunpack.c.l.b16 %v592
  %v750 = vunpack.c.h.b16 %v592
  %v751 = vunpack.c.l.b16 %v593
  %v752 = vunpack.c.h.b16 %v593
  %v753 = vunpack.c.l.b16 %v594
  %v754 = vunpack.c.h.b16 %v594
  %v755 = vunpack.c.l.b16 %v595
  %v756 = vunpack.c.h.b16 %v595
  %v757 = vunpack.c.l.b16 %v596
  %v758 = vunpack.c.h.b16 %v596
  %v759 = vunpack.c.l.b16 %v597
  %v760 = vunpack.c.h.b16 %v597
  %v761 = vunpack.c.l.b16 %v598
  %v762 = vunpack.c.h.b16 %v598
  %v763 = vunpack.c.l.b16 %v599
  %v764 = vunpack.c.h.b16 %v599
  %v765 = vunpack.c.l.b16 %v600
  %v766 = vunpack.c.h.b16 %v600
  %v767 = vunpack.c.l.b16 %v601
  %v768 = vunpack.c.h.b16 %v601
  %v769 = vunpack.c.l.b16 %v602
  %v770 = vunpack.c.h.b16 %v602
  %v771 = vunpack.c.l.b16 %v603
  %v772 = vunpack.c.h.b16 %v603
  %v773 = vunpack.c.l.b16 %v604
  %v774 = vunpack.c.h.b16 %v604
  %v775 = vunpack.c.l.b16 %v605
  %v776 = vunpack.c.h.b16 %v605
  %v777 = vunpack.c.l.b16 %v606
  %v778 = vunpack.c.h.b16 %v606
  %v779 = vunpack.c.l.b16 %v607
  %v780 = vunpack.c.h.b16 %v607
  %v781 = vunpack.c.l.b16 %v608
  %v782 = vunpack.c.h.b16 %v608
  %v783 = vunpack.c.l.b16 %v609
  %v784 = vunpack.c.h.b16 %v609
  %v785 = vunpack.c.l.b16 %v610
  %v786 = vunpack.c.h.b16 %v610
  %v787 = vunpack.c.l.b16 %v611
  %v788 = vunpack.c.h.b16 %v611
  %v789 = vunpack.c.l.b16 %v612
  %v790 = vunpack.c.h.b16 %v612
  %v791 = vunpack.c.l.b16 %v613
  %v792 = vunpack.c.h.b16 %v613
  %v793 = vunpack.c.l.b16 %v614
  %v794 = vunpack.c.h.b16 %v614
  %v795 = vunpack.c.l.b16 %v615
  %v796 = vunpack.c.h.b16 %v615
  %v797 = vunpack.c.l.b16 %v616
  %v798 = vunpack.c.h.b16 %v616
  %v799 = vunpack.c.l.b16 %v617
  %v800 = vunpack.c.h.b16 %v617
  %v801 = vunpack.c.l.b16 %v618
  %v802 = vunpack.c.h.b16 %v618
  %v803 = vunpack.c.l.b16 %v619
  %v804 = vunpack.c.h.b16 %v619
  %v805 = vunpack.c.l.b16 %v620
  %v806 = vunpack.c.h.b16 %v620
  %v807 = vunpack.c.l.b16 %v621
  %v808 = vunpack.c.h.b16 %v621
  %v809 = vunpack.c.l.b16 %v622
  %v810 = vunpack.c.h.b16 %v622
  %v811 = vunpack.c.l.b16 %v623
  %v812 = vunpack.c.h.b16 %v623
  %v813 = vunpack.c.l.b16 %v624
  %v814 = vunpack.c.h.b16 %v624
  %v815 = vunpack.c.l.b16 %v625
  %v816 = vunpack.c.h.b16 %v625
  %v817 = vunpack.c.l.b16 %v626
  %v818 = vunpack.c.h.b16 %v626
  %v819 = vpack.c.b16 %v693, %v691
  %v820 = vpack.c.b16 %v694, %v692
  %v821 = vpack.c.b16 %v697, %v695
  %v822 = vpack.c.b16 %v698, %v696
  %v823 = vpack.c.b16 %v701, %v699
  %v824 = vpack.c.b16 %v702, %v700
  %v825 = vpack.c.b16 %v705, %v703
  %v826 = vpack.c.b16 %v706, %v704
  %v827 = vpack.c.b16 %v709, %v707
  %v828 = vpack.c.b16 %v710, %v708
  %v829 = vpack.c.b16 %v713, %v711
  %v830 = vpack.c.b16 %v714, %v712
  %v831 = vpack.c.b16 %v717, %v715
  %v832 = vpack.c.b16 %v718, %v716
  %v833 = vpack.c.b16 %v721, %v719
  %v834 = vpack.c.b16 %v722, %v720
  %v835 = vpack.c.b16 %v725, %v723
  %v836 = vpack.c.b16 %v726, %v724
  %v837 = vpack.c.b16 %v729, %v727
  %v838 = vpack.c.b16 %v730, %v728
  %v839 = vpack.c.b16 %v733, %v731
  %v840 = vpack.c.b16 %v734, %v732
  %v841 = vpack.c.b16 %v737, %v735
  %v842 = vpack.c.b16 %v738, %v736
  %v843 = vpack.c.b16 %v741, %v739
  %v844 = vpack.c.b16 %v742, %v740
  %v845 = vpack.c.b16 %v745, %v743
  %v846 = vpack.c.b16 %v746, %v744
  %v847 = vpack.c.b16 %v749, %v747
  %v848 = vpack.c.b16 %v750, %v748
  %v849 = vpack.c.b16 %v753, %v751
  %v850 = vpack.c.b16 %v754, %v752
  %v851 = vpack.c.b16 %v757, %v755
  %v852 = vpack.c.b16 %v758, %v756
  %v853 = vpack.c.b16 %v761, %v759
  %v854 = vpack.c.b16 %v762, %v760
  %v855 = vpack.c.b16 %v765, %v763
  %v856 = vpack.c.b16 %v766, %v764
  %v857 = vpack.c.b16 %v769, %v767
  %v858 = vpack.c.b16 %v770, %v768
  %v859 = vpack.c.b16 %v773, %v771
  %v860 = vpack.c.b16 %v774, %v772
  %v861 = vpack.c.b16 %v777, %v775
  %v862 = vpack.c.b16 %v778, %v776
  %v863 = vpack.c.b16 %v781, %v779
  %v864 = vpack.c.b16 %v782, %v780
  %v865 = vpack.c.b16 %v785, %v783
  %v866 = vpack.c.b16 %v786, %v784
  %v867 = vpack.c.b16 %v789, %v787
  %v868 = vpack.c.b16 %v790, %v788
  %v869 = vpack.c.b16 %v793, %v791
  %v870 = vpack.c.b16 %v794, %v792
  %v871 = vpack.c.b16 %v797, %v795
  %v872 = vpack.c.b16 %v798, %v796
  %v873 = vpack.c.b16 %v801, %v799
  %v874 = vpack.c.b16 %v802, %v800
  %v875 = vpack.c.b16 %v805, %v803
  %v876 = vpack.c.b16 %v806, %v804
  %v877 = vpack.c.b16 %v809, %v807
  %v878 = vpack.c.b16 %v810, %v808
  %v879 = vpack.c.b16 %v813, %v811
  %v880 = vpack.c.b16 %v814, %v812
  %v881 = vpack.c.b16 %v817, %v815
  %v882 = vpack.c.b16 %v818, %v816
  %947 = vmatprep.subr.bf16.mxu0 %v820
  %948 = vmatpush1.bf16.msra.mxu0 %v819
  %949 = vmatprep.subr.bf16.mxu0 %v822
  %950 = vmatpush1.bf16.msra.mxu0 %v821
  %951 = vmatprep.subr.bf16.mxu0 %v824
  %952 = vmatpush1.bf16.msra.mxu0 %v823
  %953 = vmatprep.subr.bf16.mxu0 %v826
  %954 = vmatpush1.bf16.msra.mxu0 %v825
  %955 = vmatprep.subr.bf16.mxu0 %v828
  %956 = vmatpush1.bf16.msra.mxu0 %v827
  %957 = vmatprep.subr.bf16.mxu0 %v830
  %958 = vmatpush1.bf16.msra.mxu0 %v829
  %959 = vmatprep.subr.bf16.mxu0 %v832
  %960 = vmatpush1.bf16.msra.mxu0 %v831
  %961 = vmatprep.subr.bf16.mxu0 %v834
  %962 = vmatpush1.bf16.msra.mxu0 %v833
  %963 = vmatprep.subr.bf16.mxu0 %v836
  %964 = vmatpush1.bf16.msra.mxu0 %v835
  %965 = vmatprep.subr.bf16.mxu0 %v838
  %966 = vmatpush1.bf16.msra.mxu0 %v837
  %967 = vmatprep.subr.bf16.mxu0 %v840
  %968 = vmatpush1.bf16.msra.mxu0 %v839
  %969 = vmatprep.subr.bf16.mxu0 %v842
  %970 = vmatpush1.bf16.msra.mxu0 %v841
  %971 = vmatprep.subr.bf16.mxu0 %v844
  %972 = vmatpush1.bf16.msra.mxu0 %v843
  %973 = vmatprep.subr.bf16.mxu0 %v846
  %974 = vmatpush1.bf16.msra.mxu0 %v845
  %975 = vmatprep.subr.bf16.mxu0 %v848
  %976 = vmatpush1.bf16.msra.mxu0 %v847
  %977 = vmatprep.subr.bf16.mxu0 %v850
  %978 = vmatpush1.bf16.msra.mxu0 %v849
  %979 = vmatprep.mubr.bf16.mxu0 %v560
  %980 = vmatmul.mubr.bf16.gmra.mrb[0].mxu0 %v559
  %v981 = vpop.f32.mrb[0].mxu0
  %v982 = vadd.f32 0.0, %v981
  %v983 = vpop.f32.mrb[0].mxu0
  %v984 = vadd.f32 0.0, %v983
  %v985 = vpop.f32.mrb[0].mxu0
  %v986 = vpop.f32.mrb[0].mxu0
  %987 = vdwg.mxu0
  %988 = vmatprep.subr.bf16.mxu0 %v852
  %989 = vmatpush1.bf16.msra.mxu0 %v851
  %990 = vmatprep.subr.bf16.mxu0 %v854
  %991 = vmatpush1.bf16.msra.mxu0 %v853
  %992 = vmatprep.subr.bf16.mxu0 %v856
  %993 = vmatpush1.bf16.msra.mxu0 %v855
  %994 = vmatprep.subr.bf16.mxu0 %v858
  %995 = vmatpush1.bf16.msra.mxu0 %v857
  %996 = vmatprep.subr.bf16.mxu0 %v860
  %997 = vmatpush1.bf16.msra.mxu0 %v859
  %998 = vmatprep.subr.bf16.mxu0 %v862
  %999 = vmatpush1.bf16.msra.mxu0 %v861
  %1000 = vmatprep.subr.bf16.mxu0 %v864
  %1001 = vmatpush1.bf16.msra.mxu0 %v863
  %1002 = vmatprep.subr.bf16.mxu0 %v866
  %1003 = vmatpush1.bf16.msra.mxu0 %v865
  %1004 = vmatprep.subr.bf16.mxu0 %v868
  %1005 = vmatpush1.bf16.msra.mxu0 %v867
  %1006 = vmatprep.subr.bf16.mxu0 %v870
  %1007 = vmatpush1.bf16.msra.mxu0 %v869
  %1008 = vmatprep.subr.bf16.mxu0 %v872
  %1009 = vmatpush1.bf16.msra.mxu0 %v871
  %1010 = vmatprep.subr.bf16.mxu0 %v874
  %1011 = vmatpush1.bf16.msra.mxu0 %v873
  %1012 = vmatprep.subr.bf16.mxu0 %v876
  %1013 = vmatpush1.bf16.msra.mxu0 %v875
  %1014 = vmatprep.subr.bf16.mxu0 %v878
  %1015 = vmatpush1.bf16.msra.mxu0 %v877
  %1016 = vmatprep.subr.bf16.mxu0 %v880
  %1017 = vmatpush1.bf16.msra.mxu0 %v879
  %1018 = vmatprep.subr.bf16.mxu0 %v882
  %1019 = vmatpush1.bf16.msra.mxu0 %v881
  %1020 = vmatprep.mubr.bf16.mxu0 %v562
  %1021 = vmatmul.mubr.bf16.gmra.mrb[0].mxu0 %v561
  %v1022 = vpop.f32.mrb[0].mxu0
  %v1023 = vadd.f32 %v982, %v1022
  %v1024 = vpop.f32.mrb[0].mxu0
  %v1025 = vadd.f32 %v984, %v1024
  %v1026 = vpop.f32.mrb[0].mxu0
  %v1027 = vpop.f32.mrb[0].mxu0
  %1028 = vdwg.mxu0
  %v1029 = vpack.c.bf16 %v1023, %v1023
  %v1030 = vpack.c.bf16 %v1025, %v1025
  %v1031 = vld [vmem:[%s4] sm:$0x3]
  %v1033 = vlaneseq
  %v1034 = vshrl.u32 %v1033, 7
  %v1035 = vsub.s32 0, %v1034
  %v1036 = vrot.slane %v1031, %v1035
  %v1037 = vlaneseq
  %v1038 = vshrl.u32 %v1037, 7
  %v1039 = vsub.s32 1, %v1038
  %v1040 = vrot.slane %v1031, %v1039
  %v1043 = vpack.c.bf16 %v1036, %v1036
  %v1044 = vpack.c.bf16 %v1040, %v1040
  %v1046 = vpack.i.b16 %v1043, %v1043
  %v1048 = vlaneseq
  %v1049 = vshrl.u32 %v1048, 7
  %v1050 = vsub.s32 0, %v1049
  %v1051 = vrot.slane %v1046, %v1050
  %v1053 = vpack.i.b16 %v1044, %v1044
  %v1055 = vlaneseq
  %v1056 = vshrl.u32 %v1055, 7
  %v1057 = vsub.s32 0, %v1056
  %v1058 = vrot.slane %v1053, %v1057
  %v1059 = vadd.bf16 %v1029, %v1051
  %v1060 = vadd.bf16 %v1030, %v1058
  %v1061 = vtanh.bf16.pop %v1059
  %v1062 = vtanh.bf16.pop %v1060
  %v1063 = vld [vmem:[%s5] sm:$0xf]
  %v1064 = vld [vmem:[%s5 + $0x4] sm:$0xf]
  %v1065 = vld [vmem:[%s5 + $0x8] sm:$0xf]
  %v1066 = vld [vmem:[%s5 + $0xc] sm:$0xf]
  %v1067 = vld [vmem:[%s5 + $0x10] sm:$0xf]
  %v1068 = vld [vmem:[%s5 + $0x14] sm:$0xf]
  %v1069 = vld [vmem:[%s5 + $0x18] sm:$0xf]
  %v1070 = vld [vmem:[%s5 + $0x1c] sm:$0xf]
  %v1071 = vld [vmem:[%s5 + $0x20] sm:$0xf]
  %v1072 = vld [vmem:[%s5 + $0x24] sm:$0xf]
  %v1073 = vld [vmem:[%s5 + $0x28] sm:$0xf]
  %v1074 = vld [vmem:[%s5 + $0x2c] sm:$0xf]
  %v1075 = vld [vmem:[%s5 + $0x30] sm:$0xf]
  %v1076 = vld [vmem:[%s5 + $0x34] sm:$0xf]
  %v1077 = vld [vmem:[%s5 + $0x38] sm:$0xf]
  %v1078 = vld [vmem:[%s5 + $0x3c] sm:$0xf]
  %v1079 = vld [vmem:[%s5 + $0x40] sm:$0xf]
  %v1080 = vld [vmem:[%s5 + $0x44] sm:$0xf]
  %v1081 = vld [vmem:[%s5 + $0x48] sm:$0xf]
  %v1082 = vld [vmem:[%s5 + $0x4c] sm:$0xf]
  %v1083 = vld [vmem:[%s5 + $0x50] sm:$0xf]
  %v1084 = vld [vmem:[%s5 + $0x54] sm:$0xf]
  %v1085 = vld [vmem:[%s5 + $0x58] sm:$0xf]
  %v1086 = vld [vmem:[%s5 + $0x5c] sm:$0xf]
  %v1087 = vld [vmem:[%s5 + $0x60] sm:$0xf]
  %v1088 = vld [vmem:[%s5 + $0x64] sm:$0xf]
  %v1089 = vld [vmem:[%s5 + $0x68] sm:$0xf]
  %v1090 = vld [vmem:[%s5 + $0x6c] sm:$0xf]
  %v1091 = vld [vmem:[%s5 + $0x70] sm:$0xf]
  %v1092 = vld [vmem:[%s5 + $0x74] sm:$0xf]
  %v1093 = vld [vmem:[%s5 + $0x78] sm:$0xf]
  %v1094 = vld [vmem:[%s5 + $0x7c] sm:$0xf]
  %v1095 = vld [vmem:[%s6] sm:$0x1]
  %v1097 = vlaneseq
  %v1098 = vshrl.u32 %v1097, 7
  %v1099 = vsub.s32 0, %v1098
  %v1100 = vrot.slane %v1095, %v1099
  %v1134 = vunpack.c.l.b16 %v1063
  %v1135 = vunpack.c.l.b16 %v1064
  %v1136 = vunpack.c.l.b16 %v1065
  %v1137 = vunpack.c.l.b16 %v1066
  %v1138 = vunpack.c.l.b16 %v1067
  %v1139 = vunpack.c.l.b16 %v1068
  %v1140 = vunpack.c.l.b16 %v1069
  %v1141 = vunpack.c.l.b16 %v1070
  %v1142 = vunpack.c.l.b16 %v1071
  %v1143 = vunpack.c.l.b16 %v1072
  %v1144 = vunpack.c.l.b16 %v1073
  %v1145 = vunpack.c.l.b16 %v1074
  %v1146 = vunpack.c.l.b16 %v1075
  %v1147 = vunpack.c.l.b16 %v1076
  %v1148 = vunpack.c.l.b16 %v1077
  %v1149 = vunpack.c.l.b16 %v1078
  %v1150 = vunpack.c.l.b16 %v1079
  %v1151 = vunpack.c.l.b16 %v1080
  %v1152 = vunpack.c.l.b16 %v1081
  %v1153 = vunpack.c.l.b16 %v1082
  %v1154 = vunpack.c.l.b16 %v1083
  %v1155 = vunpack.c.l.b16 %v1084
  %v1156 = vunpack.c.l.b16 %v1085
  %v1157 = vunpack.c.l.b16 %v1086
  %v1158 = vunpack.c.l.b16 %v1087
  %v1159 = vunpack.c.l.b16 %v1088
  %v1160 = vunpack.c.l.b16 %v1089
  %v1161 = vunpack.c.l.b16 %v1090
  %v1162 = vunpack.c.l.b16 %v1091
  %v1163 = vunpack.c.l.b16 %v1092
  %v1164 = vunpack.c.l.b16 %v1093
  %v1165 = vunpack.c.l.b16 %v1094
  %v1166 = vpack.c.b16 %v1135, %v1134
  %v1167 = vpack.c.b16 %v1137, %v1136
  %v1168 = vpack.c.b16 %v1139, %v1138
  %v1169 = vpack.c.b16 %v1141, %v1140
  %v1170 = vpack.c.b16 %v1143, %v1142
  %v1171 = vpack.c.b16 %v1145, %v1144
  %v1172 = vpack.c.b16 %v1147, %v1146
  %v1173 = vpack.c.b16 %v1149, %v1148
  %v1174 = vpack.c.b16 %v1151, %v1150
  %v1175 = vpack.c.b16 %v1153, %v1152
  %v1176 = vpack.c.b16 %v1155, %v1154
  %v1177 = vpack.c.b16 %v1157, %v1156
  %v1178 = vpack.c.b16 %v1159, %v1158
  %v1179 = vpack.c.b16 %v1161, %v1160
  %v1180 = vpack.c.b16 %v1163, %v1162
  %v1181 = vpack.c.b16 %v1165, %v1164
  %1198 = vmatprep.subr.bf16.mxu0 0
  %1199 = vmatpush1.bf16.msra.mxu0 %v1166
  %1200 = vmatprep.subr.bf16.mxu0 0
  %1201 = vmatpush1.bf16.msra.mxu0 %v1167
  %1202 = vmatprep.subr.bf16.mxu0 0
  %1203 = vmatpush1.bf16.msra.mxu0 %v1168
  %1204 = vmatprep.subr.bf16.mxu0 0
  %1205 = vmatpush1.bf16.msra.mxu0 %v1169
  %1206 = vmatprep.subr.bf16.mxu0 0
  %1207 = vmatpush1.bf16.msra.mxu0 %v1170
  %1208 = vmatprep.subr.bf16.mxu0 0
  %1209 = vmatpush1.bf16.msra.mxu0 %v1171
  %1210 = vmatprep.subr.bf16.mxu0 0
  %1211 = vmatpush1.bf16.msra.mxu0 %v1172
  %1212 = vmatprep.subr.bf16.mxu0 0
  %1213 = vmatpush1.bf16.msra.mxu0 %v1173
  %1214 = vmatprep.subr.bf16.mxu0 0
  %1215 = vmatpush1.bf16.msra.mxu0 %v1174
  %1216 = vmatprep.subr.bf16.mxu0 0
  %1217 = vmatpush1.bf16.msra.mxu0 %v1175
  %1218 = vmatprep.subr.bf16.mxu0 0
  %1219 = vmatpush1.bf16.msra.mxu0 %v1176
  %1220 = vmatprep.subr.bf16.mxu0 0
  %1221 = vmatpush1.bf16.msra.mxu0 %v1177
  %1222 = vmatprep.subr.bf16.mxu0 0
  %1223 = vmatpush1.bf16.msra.mxu0 %v1178
  %1224 = vmatprep.subr.bf16.mxu0 0
  %1225 = vmatpush1.bf16.msra.mxu0 %v1179
  %1226 = vmatprep.subr.bf16.mxu0 0
  %1227 = vmatpush1.bf16.msra.mxu0 %v1180
  %1228 = vmatprep.subr.bf16.mxu0 0
  %1229 = vmatpush1.bf16.msra.mxu0 %v1181
  %1230 = vmatprep.mubr.bf16.mxu0 %v1062
  %1231 = vmatmul.mubr.bf16.gmra.mrb[0].mxu0 %v1061
  %v1232 = vpop.f32.mrb[0].mxu0
  %v1233 = vadd.f32 %v1100, %v1232
  %v1234 = vpop.f32.mrb[0].mxu0
  %v1235 = vpop.f32.mrb[0].mxu0
  %v1236 = vpop.f32.mrb[0].mxu0
  %1237 = vdwg.mxu0
  %1238 = vst [vmem:[%s7] sm:$0xff] %v1233
  // Predicated region
  $region30: #{policy_gaussian_forward.1} parent=0 // pred_check
    _
  $region31: #{policy_gaussian_forward.1} parent=0 // pred_check_branch
    %1240 = sbr.rel (0) target = $region33
  $region32: #{policy_gaussian_forward.1} parent=0 // pred_region
    _
  $region33: #{policy_gaussian_forward.1} parent=0 // pred_fallthru
    _
  // Predicated region
  $region34: #{policy_gaussian_forward.1} parent=0 // pred_check
    _
  $region35: #{policy_gaussian_forward.1} parent=0 // pred_check_branch
    %1242 = sbr.rel (0) target = $region37
  $region36: #{policy_gaussian_forward.1} parent=0 // pred_region
    _
  $region37: #{policy_gaussian_forward.1} parent=0 // pred_fallthru
    _

</llo_original>
